<compile_context>
chip_gen: v7x
topology: tpu7x:2x2x1
jax: 0.10.0
libtpu: 0.0.40
codegen_flags: <defaults>
</compile_context>

<pallas_src>
import math

import jax
import jax.numpy as jnp
from jax.experimental import pallas as pl
from jax.experimental.pallas import tpu as pltpu

_TM_MAX = 512          # max row tile per modality (x3 modalities per grid step)
_LANE = 128            # lane-dense feature padding


def _round_up(x, m):
    return ((x + m - 1) // m) * m


def _cdiv(a, b):
    return (a + b - 1) // b


def _ffn_kernel(*refs):
    """refs = (x_1..x_n, w1, b1, w2, b2, o_1..o_n)."""
    n = (len(refs) - 4) // 2
    in_refs = refs[:n]
    w1_ref, b1_ref, w2_ref, b2_ref = refs[n:n + 4]
    out_refs = refs[n + 4:]

    w1 = w1_ref[...]          # bf16 [Dp, Hp]
    b1 = b1_ref[...]          # f32  [1, Hp]
    w2 = w2_ref[...]          # bf16 [Hp, Hp]
    b2 = b2_ref[...]          # f32  [1, Hp]

    # Unrolled over the (static, small) number of modalities; the shared
    # weights stay in vregs/VMEM across all three matmul pairs.
    for x_ref, o_ref in zip(in_refs, out_refs):
        x = x_ref[...].astype(w1.dtype)
        h = jnp.dot(x, w1, preferred_element_type=jnp.float32) + b1
        h = jnp.maximum(h, 0.0)
        o = jnp.dot(h.astype(w2.dtype), w2,
                    preferred_element_type=jnp.float32) + b2
        o_ref[...] = o.astype(o_ref.dtype)


def _ffn_forward(xs, w1p, b1p, w2p, b2p, out_dtype):
    """xs: list of 2-D [M, Dp] arrays (same M, feature dim already padded)."""
    n = len(xs)
    M, Dp = xs[0].shape
    Hp = w1p.shape[1]

    # Row tiling that minimises padding: split M into the fewest <=512-row
    # tiles, then round the per-tile size up to the 8-row sublane granule.
    ntiles = max(1, _cdiv(M, _TM_MAX))
    tm = _round_up(_cdiv(M, ntiles), 8)
    Mp = ntiles * tm
    if Mp != M:
        xs = [jnp.pad(a, ((0, Mp - M), (0, 0))) for a in xs]
    grid = (ntiles,)

    in_specs = (
        [pl.BlockSpec((tm, Dp), lambda i: (i, 0)) for _ in range(n)]
        + [
            # Constant index maps -> weights/biases resident in VMEM for the
            # whole grid (single DMA).
            pl.BlockSpec((Dp, Hp), lambda i: (0, 0)),
            pl.BlockSpec((1, Hp), lambda i: (0, 0)),
            pl.BlockSpec((Hp, Hp), lambda i: (0, 0)),
            pl.BlockSpec((1, Hp), lambda i: (0, 0)),
        ]
    )
    out_specs = [pl.BlockSpec((tm, Hp), lambda i: (i, 0)) for _ in range(n)]
    out_shape = [jax.ShapeDtypeStruct((Mp, Hp), out_dtype) for _ in range(n)]

    # Advisory cost estimate for the XLA scheduler.
    flops = 2 * n * Mp * (Dp * Hp + Hp * Hp)
    w_itemsize = jnp.dtype(w1p.dtype).itemsize
    bytes_accessed = (
        n * Mp * Dp * 4              # activation reads (f32)
        + n * Mp * Hp * 4            # output writes (f32)
        + (Dp * Hp + Hp * Hp) * w_itemsize
        + 2 * Hp * 4
    )

    # VMEM budget: resident weights, double-buffered activation/output tiles,
    # f32 intermediates + slack.  Capped at 48 MiB (fits v7x's 64 MiB VMEM).
    weight_bytes = (Dp * Hp + Hp * Hp) * w_itemsize + 2 * Hp * 4
    act_bytes = 2 * n * tm * (Dp + Hp) * 4      # 2x for double buffering
    scratch_bytes = n * tm * Hp * 4
    vmem_limit = int(min(max(2 * weight_bytes + act_bytes + scratch_bytes
                             + (4 << 20), 16 << 20), 48 << 20))

    outs = pl.pallas_call(
        _ffn_kernel,
        out_shape=out_shape,
        grid_spec=pltpu.PrefetchScalarGridSpec(
            num_scalar_prefetch=0,
            grid=grid,
            in_specs=in_specs,
            out_specs=out_specs,
        ),
        compiler_params=pltpu.CompilerParams(
            dimension_semantics=("parallel",),   # row axis shards across TCs
            vmem_limit_bytes=vmem_limit,
        ),
        cost_estimate=pl.CostEstimate(
            flops=flops, transcendentals=0, bytes_accessed=bytes_accessed),
    )(*xs, w1p, b1p, w2p, b2p)

    return [o[:M] for o in list(outs)]


class ModalityFFNPallas:
    """JAX/Pallas port of ModalityFFN: shared Linear->ReLU->Linear over 3 inputs."""

    def __init__(self, in_dim, hid_dim, key, weight_dtype=jnp.bfloat16):
        self.in_dim = in_dim
        self.hid_dim = hid_dim
        k1, k2, k3, k4 = jax.random.split(key, 4)
        lim1 = 1.0 / math.sqrt(in_dim)
        lim2 = 1.0 / math.sqrt(hid_dim)
        # Master (f32) parameters, PyTorch-Linear-style init (LazyLinear
        # materialises to the same thing once the input dim is known).
        self.w1 = jax.random.uniform(k1, (in_dim, hid_dim), jnp.float32, -lim1, lim1)
        self.b1 = jax.random.uniform(k2, (hid_dim,), jnp.float32, -lim1, lim1)
        self.w2 = jax.random.uniform(k3, (hid_dim, hid_dim), jnp.float32, -lim2, lim2)
        self.b2 = jax.random.uniform(k4, (hid_dim,), jnp.float32, -lim2, lim2)

        # Lane-dense, zero-padded kernel parameters; weights bf16, biases f32.
        Dp = _round_up(in_dim, _LANE)
        Hp = _round_up(hid_dim, _LANE)
        self.d_pad, self.h_pad = Dp, Hp
        self.w1p = jnp.zeros((Dp, Hp), weight_dtype).at[:in_dim, :hid_dim].set(
            self.w1.astype(weight_dtype))
        self.b1p = jnp.zeros((1, Hp), jnp.float32).at[0, :hid_dim].set(self.b1)
        self.w2p = jnp.zeros((Hp, Hp), weight_dtype).at[:hid_dim, :hid_dim].set(
            self.w2.astype(weight_dtype))
        self.b2p = jnp.zeros((1, Hp), jnp.float32).at[0, :hid_dim].set(self.b2)

    def _to2d(self, a):
        a2 = a.reshape(-1, a.shape[-1])
        if a.shape[-1] != self.d_pad:
            a2 = jnp.pad(a2, ((0, 0), (0, self.d_pad - a.shape[-1])))
        return a2

    def __call__(self, x, pos_x, neg_x):
        inputs = (x, pos_x, neg_x)
        shapes = [a.shape for a in inputs]
        xs = [self._to2d(a) for a in inputs]

        if all(a.shape == xs[0].shape for a in xs):
            # Fused path: one kernel, shared weights loaded once for all 3.
            outs = _ffn_forward(xs, self.w1p, self.b1p, self.w2p, self.b2p,
                                x.dtype)
        else:
            # Fallback for differently-shaped inputs: one call per modality.
            outs = [
                _ffn_forward([a], self.w1p, self.b1p, self.w2p, self.b2p,
                             a.dtype)[0]
                for a in xs
            ]

        H = self.hid_dim
        outs = [o[:, :H] for o in outs]   # drop hidden-dim padding (no-op if aligned)
        return tuple(o.reshape(s[:-1] + (H,)) for o, s in zip(outs, shapes))


def _reference(ffn, x, pos_x, neg_x):
    """Pure-JAX reference mirroring the kernel's bf16-weight / f32-accum math."""
    w1 = ffn.w1.astype(jnp.bfloat16)
    w2 = ffn.w2.astype(jnp.bfloat16)

    def f(a):
        h = jnp.dot(a.astype(jnp.bfloat16), w1,
                    preferred_element_type=jnp.float32) + ffn.b1
        h = jnp.maximum(h, 0.0)
        return jnp.dot(h.astype(jnp.bfloat16), w2,
                       preferred_element_type=jnp.float32) + ffn.b2

    return f(x), f(pos_x), f(neg_x)


if __name__ == "__main__":
    key = jax.random.PRNGKey(0)
    kp, kx, kpx, knx = jax.random.split(key, 4)

    B, S, D_in, HID = 2, 8, 32, 32
    x = jax.random.normal(kx, (B, S, D_in), jnp.float32)
    pos_x = jax.random.normal(kpx, (B, S, D_in), jnp.float32)
    neg_x = jax.random.normal(knx, (B, S, D_in), jnp.float32)

    ffn = ModalityFFNPallas(D_in, HID, kp)

    out_x, out_pos, out_neg = ffn(x, pos_x, neg_x)
    jax.block_until_ready((out_x, out_pos, out_neg))

    ref_x, ref_pos, ref_neg = _reference(ffn, x, pos_x, neg_x)
    assert out_x.shape == (B, S, HID)
    assert jnp.allclose(out_x, ref_x, atol=2e-2, rtol=2e-2)
    assert jnp.allclose(out_pos, ref_pos, atol=2e-2, rtol=2e-2)
    assert jnp.allclose(out_neg, ref_neg, atol=2e-2, rtol=2e-2)

    # Row count not divisible by the tile (exercises row padding / trim path).
    x2 = jax.random.normal(kx, (2, 5, D_in), jnp.float32)
    o2, o2p, o2n = ffn(x2, x2, x2)
    jax.block_until_ready((o2, o2p, o2n))
    r2, _, _ = _reference(ffn, x2, x2, x2)
    assert o2.shape == (2, 5, HID)
    assert jnp.allclose(o2, r2, atol=2e-2, rtol=2e-2)

    print("KERNEL_OK")
</pallas_src>

<mosaic_0001>
module attributes {stable_mosaic.version = 11 : i64} {
  func.func @_ffn_kernel(%arg0: i32, %arg1: memref<16x128xf32, #tpu.memory_space<vmem>>, %arg2: memref<16x128xf32, #tpu.memory_space<vmem>>, %arg3: memref<16x128xf32, #tpu.memory_space<vmem>>, %arg4: memref<128x128xbf16, #tpu.memory_space<vmem>>, %arg5: memref<1x128xf32, #tpu.memory_space<vmem>>, %arg6: memref<128x128xbf16, #tpu.memory_space<vmem>>, %arg7: memref<1x128xf32, #tpu.memory_space<vmem>>, %arg8: memref<16x128xf32, #tpu.memory_space<vmem>>, %arg9: memref<16x128xf32, #tpu.memory_space<vmem>>, %arg10: memref<16x128xf32, #tpu.memory_space<vmem>>) attributes {dimension_semantics = [#tpu.dimension_semantics<parallel>], iteration_bounds = array<i64: 1>, scalar_prefetch = 0 : i64, scratch_operands = 0 : i64, tpu.core_type = #tpu.core_type<tc>, window_params = [{transform_indices = @transform_0, window_bounds = array<i64: 16, 128>}, {transform_indices = @transform_1, window_bounds = array<i64: 16, 128>}, {transform_indices = @transform_2, window_bounds = array<i64: 16, 128>}, {pipeline_mode = #tpu.pipeline_mode<synchronous>, transform_indices = @transform_3, window_bounds = array<i64: 128, 128>}, {pipeline_mode = #tpu.pipeline_mode<synchronous>, transform_indices = @transform_4, window_bounds = array<i64: 1, 128>}, {pipeline_mode = #tpu.pipeline_mode<synchronous>, transform_indices = @transform_5, window_bounds = array<i64: 128, 128>}, {pipeline_mode = #tpu.pipeline_mode<synchronous>, transform_indices = @transform_6, window_bounds = array<i64: 1, 128>}, {transform_indices = @transform_7, window_bounds = array<i64: 16, 128>}, {transform_indices = @transform_8, window_bounds = array<i64: 16, 128>}, {transform_indices = @transform_9, window_bounds = array<i64: 16, 128>}]} {
    %c0 = arith.constant 0 : index
    %c0_0 = arith.constant 0 : index
    %0 = vector.load %arg4[%c0, %c0_0] : memref<128x128xbf16, #tpu.memory_space<vmem>>, vector<128x128xbf16>
    %c0_1 = arith.constant 0 : index
    %c0_2 = arith.constant 0 : index
    %1 = vector.load %arg5[%c0_1, %c0_2] : memref<1x128xf32, #tpu.memory_space<vmem>>, vector<1x128xf32>
    %c0_3 = arith.constant 0 : index
    %c0_4 = arith.constant 0 : index
    %2 = vector.load %arg6[%c0_3, %c0_4] : memref<128x128xbf16, #tpu.memory_space<vmem>>, vector<128x128xbf16>
    %c0_5 = arith.constant 0 : index
    %c0_6 = arith.constant 0 : index
    %3 = vector.load %arg7[%c0_5, %c0_6] : memref<1x128xf32, #tpu.memory_space<vmem>>, vector<1x128xf32>
    %c0_7 = arith.constant 0 : index
    %c0_8 = arith.constant 0 : index
    %4 = vector.load %arg1[%c0_7, %c0_8] : memref<16x128xf32, #tpu.memory_space<vmem>>, vector<16x128xf32>
    %5 = arith.truncf %4 : vector<16x128xf32> to vector<16x128xbf16>
    %cst = arith.constant dense<0.000000e+00> : vector<16x128xf32>
    %6 = tpu.matmul %5, %0, %cst {dimension_numbers = #tpu.dot_dimension_numbers<[1], [0], [0], [1], [0, 0, 1, 1], [], []>} : vector<16x128xbf16>, vector<128x128xbf16>, vector<16x128xf32> -> vector<16x128xf32>
    %7 = vector.broadcast %1 : vector<1x128xf32> to vector<16x128xf32>
    %8 = arith.addf %6, %7 : vector<16x128xf32>
    %cst_9 = arith.constant 0.000000e+00 : f32
    %9 = vector.broadcast %cst_9 : f32 to vector<16x128xf32>
    %10 = arith.maximumf %8, %9 : vector<16x128xf32>
    %11 = arith.truncf %10 : vector<16x128xf32> to vector<16x128xbf16>
    %cst_10 = arith.constant dense<0.000000e+00> : vector<16x128xf32>
    %12 = tpu.matmul %11, %2, %cst_10 {dimension_numbers = #tpu.dot_dimension_numbers<[1], [0], [0], [1], [0, 0, 1, 1], [], []>} : vector<16x128xbf16>, vector<128x128xbf16>, vector<16x128xf32> -> vector<16x128xf32>
    %13 = vector.broadcast %3 : vector<1x128xf32> to vector<16x128xf32>
    %14 = arith.addf %12, %13 : vector<16x128xf32>
    %c0_11 = arith.constant 0 : index
    %c0_12 = arith.constant 0 : index
    %15 = vector.load %arg8[%c0_11, %c0_12] : memref<16x128xf32, #tpu.memory_space<vmem>>, vector<16x128xf32>
    tpu.vector_store %arg8[%c0_11, %c0_12], %14 {strides = array<i32>} : memref<16x128xf32, #tpu.memory_space<vmem>>, vector<16x128xf32>,
    %c0_13 = arith.constant 0 : index
    %c0_14 = arith.constant 0 : index
    %16 = vector.load %arg2[%c0_13, %c0_14] : memref<16x128xf32, #tpu.memory_space<vmem>>, vector<16x128xf32>
    %17 = arith.truncf %16 : vector<16x128xf32> to vector<16x128xbf16>
    %cst_15 = arith.constant dense<0.000000e+00> : vector<16x128xf32>
    %18 = tpu.matmul %17, %0, %cst_15 {dimension_numbers = #tpu.dot_dimension_numbers<[1], [0], [0], [1], [0, 0, 1, 1], [], []>} : vector<16x128xbf16>, vector<128x128xbf16>, vector<16x128xf32> -> vector<16x128xf32>
    %19 = vector.broadcast %1 : vector<1x128xf32> to vector<16x128xf32>
    %20 = arith.addf %18, %19 : vector<16x128xf32>
    %cst_16 = arith.constant 0.000000e+00 : f32
    %21 = vector.broadcast %cst_16 : f32 to vector<16x128xf32>
    %22 = arith.maximumf %20, %21 : vector<16x128xf32>
    %23 = arith.truncf %22 : vector<16x128xf32> to vector<16x128xbf16>
    %cst_17 = arith.constant dense<0.000000e+00> : vector<16x128xf32>
    %24 = tpu.matmul %23, %2, %cst_17 {dimension_numbers = #tpu.dot_dimension_numbers<[1], [0], [0], [1], [0, 0, 1, 1], [], []>} : vector<16x128xbf16>, vector<128x128xbf16>, vector<16x128xf32> -> vector<16x128xf32>
    %25 = vector.broadcast %3 : vector<1x128xf32> to vector<16x128xf32>
    %26 = arith.addf %24, %25 : vector<16x128xf32>
    %c0_18 = arith.constant 0 : index
    %c0_19 = arith.constant 0 : index
    %27 = vector.load %arg9[%c0_18, %c0_19] : memref<16x128xf32, #tpu.memory_space<vmem>>, vector<16x128xf32>
    tpu.vector_store %arg9[%c0_18, %c0_19], %26 {strides = array<i32>} : memref<16x128xf32, #tpu.memory_space<vmem>>, vector<16x128xf32>,
    %c0_20 = arith.constant 0 : index
    %c0_21 = arith.constant 0 : index
    %28 = vector.load %arg3[%c0_20, %c0_21] : memref<16x128xf32, #tpu.memory_space<vmem>>, vector<16x128xf32>
    %29 = arith.truncf %28 : vector<16x128xf32> to vector<16x128xbf16>
    %cst_22 = arith.constant dense<0.000000e+00> : vector<16x128xf32>
    %30 = tpu.matmul %29, %0, %cst_22 {dimension_numbers = #tpu.dot_dimension_numbers<[1], [0], [0], [1], [0, 0, 1, 1], [], []>} : vector<16x128xbf16>, vector<128x128xbf16>, vector<16x128xf32> -> vector<16x128xf32>
    %31 = vector.broadcast %1 : vector<1x128xf32> to vector<16x128xf32>
    %32 = arith.addf %30, %31 : vector<16x128xf32>
    %cst_23 = arith.constant 0.000000e+00 : f32
    %33 = vector.broadcast %cst_23 : f32 to vector<16x128xf32>
    %34 = arith.maximumf %32, %33 : vector<16x128xf32>
    %35 = arith.truncf %34 : vector<16x128xf32> to vector<16x128xbf16>
    %cst_24 = arith.constant dense<0.000000e+00> : vector<16x128xf32>
    %36 = tpu.matmul %35, %2, %cst_24 {dimension_numbers = #tpu.dot_dimension_numbers<[1], [0], [0], [1], [0, 0, 1, 1], [], []>} : vector<16x128xbf16>, vector<128x128xbf16>, vector<16x128xf32> -> vector<16x128xf32>
    %37 = vector.broadcast %3 : vector<1x128xf32> to vector<16x128xf32>
    %38 = arith.addf %36, %37 : vector<16x128xf32>
    %c0_25 = arith.constant 0 : index
    %c0_26 = arith.constant 0 : index
    %39 = vector.load %arg10[%c0_25, %c0_26] : memref<16x128xf32, #tpu.memory_space<vmem>>, vector<16x128xf32>
    tpu.vector_store %arg10[%c0_25, %c0_26], %38 {strides = array<i32>} : memref<16x128xf32, #tpu.memory_space<vmem>>, vector<16x128xf32>,
    return
  }
  func.func @transform_0(%arg0: i32) -> (i32, i32) {
    %c0_i32 = arith.constant 0 : i32
    %c0_i32_0 = arith.constant 0 : i32
    return %arg0, %c0_i32 : i32, i32
  }
  func.func @transform_1(%arg0: i32) -> (i32, i32) {
    %c0_i32 = arith.constant 0 : i32
    %c0_i32_0 = arith.constant 0 : i32
    return %arg0, %c0_i32 : i32, i32
  }
  func.func @transform_2(%arg0: i32) -> (i32, i32) {
    %c0_i32 = arith.constant 0 : i32
    %c0_i32_0 = arith.constant 0 : i32
    return %arg0, %c0_i32 : i32, i32
  }
  func.func @transform_3(%arg0: i32) -> (i32, i32) {
    %c0_i32 = arith.constant 0 : i32
    %c0_i32_0 = arith.constant 0 : i32
    %c0_i32_1 = arith.constant 0 : i32
    return %c0_i32, %c0_i32_0 : i32, i32
  }
  func.func @transform_4(%arg0: i32) -> (i32, i32) {
    %c0_i32 = arith.constant 0 : i32
    %c0_i32_0 = arith.constant 0 : i32
    %c0_i32_1 = arith.constant 0 : i32
    return %c0_i32, %c0_i32_0 : i32, i32
  }
  func.func @transform_5(%arg0: i32) -> (i32, i32) {
    %c0_i32 = arith.constant 0 : i32
    %c0_i32_0 = arith.constant 0 : i32
    %c0_i32_1 = arith.constant 0 : i32
    return %c0_i32, %c0_i32_0 : i32, i32
  }
  func.func @transform_6(%arg0: i32) -> (i32, i32) {
    %c0_i32 = arith.constant 0 : i32
    %c0_i32_0 = arith.constant 0 : i32
    %c0_i32_1 = arith.constant 0 : i32
    return %c0_i32, %c0_i32_0 : i32, i32
  }
  func.func @transform_7(%arg0: i32) -> (i32, i32) {
    %c0_i32 = arith.constant 0 : i32
    %c0_i32_0 = arith.constant 0 : i32
    return %arg0, %c0_i32 : i32, i32
  }
  func.func @transform_8(%arg0: i32) -> (i32, i32) {
    %c0_i32 = arith.constant 0 : i32
    %c0_i32_0 = arith.constant 0 : i32
    return %arg0, %c0_i32 : i32, i32
  }
  func.func @transform_9(%arg0: i32) -> (i32, i32) {
    %c0_i32 = arith.constant 0 : i32
    %c0_i32_0 = arith.constant 0 : i32
    return %arg0, %c0_i32 : i32, i32
  }
}

</mosaic_0001>

<llo_original>
// kernel: tpu_custom_call.1
$region0: #{tpu_custom_call.1}
  #allocation0 [shape = 'u32[]', space=smem, size = 0x4, offset = 0x4, fixed_abs, tag = 'smem constant byte address 0x4 - core index']
  #allocation1 [shape = 'u32[144,128]{1,0:T(1,128)}', space=vmem, size = 0x12000, scoped, tag = 'internal scratch']
  %s0 = inlined_call_operand.hbm [shape: f32[16,128], index: 0, kind: input, shape index: {}]
  %s1 = inlined_call_operand.hbm [shape: f32[16,128], index: 1, kind: input, shape index: {}]
  %s2 = inlined_call_operand.hbm [shape: f32[16,128], index: 2, kind: input, shape index: {}]
  %s3 = inlined_call_operand.hbm [shape: bf16[128,128], index: 3, kind: input, shape index: {}]
  %s4 = inlined_call_operand.vmem [shape: f32[1,128], index: 4, kind: input, shape index: {}]
  %s5 = inlined_call_operand.hbm [shape: bf16[128,128], index: 5, kind: input, shape index: {}]
  %s6 = inlined_call_operand.vmem [shape: f32[1,128], index: 6, kind: input, shape index: {}]
  %s7 = inlined_call_operand.hbm [shape: f32[16,128], index: 7, kind: output, shape index: {0}]
  %s8 = inlined_call_operand.hbm [shape: f32[16,128], index: 8, kind: output, shape index: {1}]
  %s9 = inlined_call_operand.hbm [shape: f32[16,128], index: 9, kind: output, shape index: {2}]
  %10 = xla_tuple %s7, %s8, %s9
  %s11 = sld [smem:[#allocation0]]
  $region74: #{tpu_custom_call.1} parent=0
    _
  %s13 = ssub.s32 1, %s11
  %s14 = scalar_select 0, %s13, %s11
  $region1: #{tpu_custom_call.1} parent=0
    #allocation2 [shape = 'u8[8192]{0}', space=vmem, size = 0x2000, scoped, tag = 'input window, operand 0, single buffered']
    #allocation3 [shape = 's32[1]{0}', space=sflag, size = 0x4, scoped, tag = 'scoped memory for tpu_custom_call.1']
    #allocation4 [shape = 's32[1]{0}', space=sflag, size = 0x4, scoped, tag = 'scoped memory for tpu_custom_call.1']
    #allocation5 [shape = 'u8[8192]{0}', space=vmem, size = 0x2000, scoped, tag = 'input window, operand 1, single buffered']
    #allocation6 [shape = 's32[1]{0}', space=sflag, size = 0x4, scoped, tag = 'scoped memory for tpu_custom_call.1']
    #allocation7 [shape = 'u8[8192]{0}', space=vmem, size = 0x2000, scoped, tag = 'input window, operand 2, single buffered']
    #allocation8 [shape = 'u8[32768]{0}', space=vmem, size = 0x8000, scoped, tag = 'input window, operand 3, single buffered']
    #allocation9 [shape = 's32[1]{0}', space=sflag, size = 0x4, scoped, tag = 'scoped memory for tpu_custom_call.1']
    #allocation10 [shape = 'u8[32768]{0}', space=vmem, size = 0x8000, scoped, tag = 'input window, operand 5, single buffered']
    #allocation11 [shape = 'u8[8192]{0}', space=vmem, size = 0x2000, scoped, tag = 'output window, operand 0, single buffered']
    #allocation12 [shape = 'u8[8192]{0}', space=vmem, size = 0x2000, scoped, tag = 'output window, operand 1, single buffered']
    #allocation13 [shape = 's32[1]{0}', space=sflag, size = 0x4, scoped, tag = 'scoped memory for tpu_custom_call.1']
    #allocation14 [shape = 'u8[8192]{0}', space=vmem, size = 0x2000, scoped, tag = 'output window, operand 2, single buffered']
    %15 = vsyncpa [#allocation3], 0
    %16 = vsyncpa [#allocation6], 0
    %17 = vsyncpa [#allocation9], 0
    %18 = vsyncpa [#allocation4], 0
    %19 = vsyncpa [#allocation13], 0
    // Predicated region
    $region2: #{tpu_custom_call.1} parent=1 // pred_check
      _
    $region3: #{tpu_custom_call.1} parent=1 // pred_check_branch
      %21 = sbr.rel (0) target = $region5
    $region4: #{tpu_custom_call.1} parent=1 // pred_region
      %s23 = ssub.s32 256, 256
      %24 = vsyncadd [#allocation3], %s23
      %s25 = sshll.u32 [#allocation2], 4
      %s26 = int_to_ptr.vmem [resolvable:$true] %s25
      %31 = dma.hbm_to_vmem [thread:$0]  %s0, 256, %s26, [#allocation3], 128, 128, 8
    $region5: #{tpu_custom_call.1} parent=1 // pred_fallthru
      _
    // Predicated region
    $region6: #{tpu_custom_call.1} parent=1 // pred_check
      _
    $region7: #{tpu_custom_call.1} parent=1 // pred_check_branch
      %33 = sbr.rel (0) target = $region9
    $region8: #{tpu_custom_call.1} parent=1 // pred_region
      %s35 = ssub.s32 256, 256
      %36 = vsyncadd [#allocation6], %s35
      %s37 = sshll.u32 [#allocation5], 4
      %s38 = int_to_ptr.vmem [resolvable:$true] %s37
      %43 = dma.hbm_to_vmem [thread:$0]  %s1, 256, %s38, [#allocation6], 128, 128, 8
    $region9: #{tpu_custom_call.1} parent=1 // pred_fallthru
      _
    // Predicated region
    $region10: #{tpu_custom_call.1} parent=1 // pred_check
      _
    $region11: #{tpu_custom_call.1} parent=1 // pred_check_branch
      %45 = sbr.rel (0) target = $region13
    $region12: #{tpu_custom_call.1} parent=1 // pred_region
      %s47 = ssub.s32 256, 256
      %48 = vsyncadd [#allocation6], %s47
      %s49 = sshll.u32 [#allocation7], 4
      %s50 = int_to_ptr.vmem [resolvable:$true] %s49
      %55 = dma.hbm_to_vmem [thread:$0]  %s2, 256, %s50, [#allocation6], 128, 128, 8
    $region13: #{tpu_custom_call.1} parent=1 // pred_fallthru
      _
    // Predicated region
    $region14: #{tpu_custom_call.1} parent=1 // pred_check
      _
    $region15: #{tpu_custom_call.1} parent=1 // pred_check_branch
      %57 = sbr.rel (0) target = $region17
    $region16: #{tpu_custom_call.1} parent=1 // pred_region
      %s59 = ssub.s32 1024, 1024
      %60 = vsyncadd [#allocation9], %s59
      %s61 = sshll.u32 [#allocation8], 4
      %s62 = int_to_ptr.vmem [resolvable:$true] %s61
      %67 = dma.hbm_to_vmem [thread:$0]  %s3, 1024, %s62, [#allocation9], 64, 64, 4
    $region17: #{tpu_custom_call.1} parent=1 // pred_fallthru
      _
    // Predicated region
    $region18: #{tpu_custom_call.1} parent=1 // pred_check
      _
    $region19: #{tpu_custom_call.1} parent=1 // pred_check_branch
      %69 = sbr.rel (0) target = $region21
    $region20: #{tpu_custom_call.1} parent=1 // pred_region
      _
    $region21: #{tpu_custom_call.1} parent=1 // pred_fallthru
      _
    // Predicated region
    $region22: #{tpu_custom_call.1} parent=1 // pred_check
      _
    $region23: #{tpu_custom_call.1} parent=1 // pred_check_branch
      %71 = sbr.rel (0) target = $region25
    $region24: #{tpu_custom_call.1} parent=1 // pred_region
      %s73 = ssub.s32 1024, 1024
      %74 = vsyncadd [#allocation9], %s73
      %s75 = sshll.u32 [#allocation10], 4
      %s76 = int_to_ptr.vmem [resolvable:$true] %s75
      %81 = dma.hbm_to_vmem [thread:$0]  %s5, 1024, %s76, [#allocation9], 64, 64, 4
    $region25: #{tpu_custom_call.1} parent=1 // pred_fallthru
      _
    // Predicated region
    $region26: #{tpu_custom_call.1} parent=1 // pred_check
      _
    $region27: #{tpu_custom_call.1} parent=1 // pred_check_branch
      %83 = sbr.rel (0) target = $region29
    $region28: #{tpu_custom_call.1} parent=1 // pred_region
      _
    $region29: #{tpu_custom_call.1} parent=1 // pred_fallthru
      _
    // Predicated region
    $region30: #{tpu_custom_call.1} parent=1 // pred_check
      _
    $region31: #{tpu_custom_call.1} parent=1 // pred_check_branch
      %85 = sbr.rel (0) target = $region33
    $region32: #{tpu_custom_call.1} parent=1 // pred_region
      %86 = dma.done [#allocation3], 256
    $region33: #{tpu_custom_call.1} parent=1 // pred_fallthru
      _
    // Predicated region
    $region34: #{tpu_custom_call.1} parent=1 // pred_check
      _
    $region35: #{tpu_custom_call.1} parent=1 // pred_check_branch
      %88 = sbr.rel (0) target = $region37
    $region36: #{tpu_custom_call.1} parent=1 // pred_region
      %89 = dma.done [#allocation6], 256
    $region37: #{tpu_custom_call.1} parent=1 // pred_fallthru
      _
    // Predicated region
    $region38: #{tpu_custom_call.1} parent=1 // pred_check
      _
    $region39: #{tpu_custom_call.1} parent=1 // pred_check_branch
      %91 = sbr.rel (0) target = $region41
    $region40: #{tpu_custom_call.1} parent=1 // pred_region
      %92 = dma.done [#allocation6], 256
    $region41: #{tpu_custom_call.1} parent=1 // pred_fallthru
      _
    // Predicated region
    $region42: #{tpu_custom_call.1} parent=1 // pred_check
      _
    $region43: #{tpu_custom_call.1} parent=1 // pred_check_branch
      %94 = sbr.rel (0) target = $region45
    $region44: #{tpu_custom_call.1} parent=1 // pred_region
      %95 = dma.done [#allocation9], 1024
    $region45: #{tpu_custom_call.1} parent=1 // pred_fallthru
      _
    // Predicated region
    $region46: #{tpu_custom_call.1} parent=1 // pred_check
      _
    $region47: #{tpu_custom_call.1} parent=1 // pred_check_branch
      %97 = sbr.rel (0) target = $region49
    $region48: #{tpu_custom_call.1} parent=1 // pred_region
      %98 = dma.done [#allocation9], 1024
    $region49: #{tpu_custom_call.1} parent=1 // pred_fallthru
      _
    %v100 = vld [vmem:[#allocation8] sm:$0xf]
    %v101 = vld [vmem:[#allocation8 + $0x4] sm:$0xf]
    %v102 = vld [vmem:[#allocation8 + $0x8] sm:$0xf]
    %v103 = vld [vmem:[#allocation8 + $0xc] sm:$0xf]
    %v104 = vld [vmem:[#allocation8 + $0x10] sm:$0xf]
    %v105 = vld [vmem:[#allocation8 + $0x14] sm:$0xf]
    %v106 = vld [vmem:[#allocation8 + $0x18] sm:$0xf]
    %v107 = vld [vmem:[#allocation8 + $0x1c] sm:$0xf]
    %v108 = vld [vmem:[#allocation8 + $0x20] sm:$0xf]
    %v109 = vld [vmem:[#allocation8 + $0x24] sm:$0xf]
    %v110 = vld [vmem:[#allocation8 + $0x28] sm:$0xf]
    %v111 = vld [vmem:[#allocation8 + $0x2c] sm:$0xf]
    %v112 = vld [vmem:[#allocation8 + $0x30] sm:$0xf]
    %v113 = vld [vmem:[#allocation8 + $0x34] sm:$0xf]
    %v114 = vld [vmem:[#allocation8 + $0x38] sm:$0xf]
    %v115 = vld [vmem:[#allocation8 + $0x3c] sm:$0xf]
    %v116 = vld [vmem:[%s4] sm:$0x1]
    %v117 = vld [vmem:[#allocation10] sm:$0xf]
    %v118 = vld [vmem:[#allocation10 + $0x4] sm:$0xf]
    %v119 = vld [vmem:[#allocation10 + $0x8] sm:$0xf]
    %v120 = vld [vmem:[#allocation10 + $0xc] sm:$0xf]
    %v121 = vld [vmem:[#allocation10 + $0x10] sm:$0xf]
    %v122 = vld [vmem:[#allocation10 + $0x14] sm:$0xf]
    %v123 = vld [vmem:[#allocation10 + $0x18] sm:$0xf]
    %v124 = vld [vmem:[#allocation10 + $0x1c] sm:$0xf]
    %v125 = vld [vmem:[#allocation10 + $0x20] sm:$0xf]
    %v126 = vld [vmem:[#allocation10 + $0x24] sm:$0xf]
    %v127 = vld [vmem:[#allocation10 + $0x28] sm:$0xf]
    %v128 = vld [vmem:[#allocation10 + $0x2c] sm:$0xf]
    %v129 = vld [vmem:[#allocation10 + $0x30] sm:$0xf]
    %v130 = vld [vmem:[#allocation10 + $0x34] sm:$0xf]
    %v131 = vld [vmem:[#allocation10 + $0x38] sm:$0xf]
    %v132 = vld [vmem:[#allocation10 + $0x3c] sm:$0xf]
    %v133 = vld [vmem:[%s6] sm:$0x1]
    %v134 = vld [vmem:[#allocation2] sm:$0xff]
    %v135 = vld [vmem:[#allocation2 + $0x8] sm:$0xff]
    %v136 = vpack.c.bf16 %v135, %v134
    %v138 = vlaneseq
    %v139 = vshrl.u32 %v138, 7
    %v140 = vsub.s32 0, %v139
    %v141 = vrot.slane %v116, %v140
    %v159 = vunpack.c.l.b16 %v100
    %v160 = vunpack.c.l.b16 %v101
    %v161 = vunpack.c.l.b16 %v102
    %v162 = vunpack.c.l.b16 %v103
    %v163 = vunpack.c.l.b16 %v104
    %v164 = vunpack.c.l.b16 %v105
    %v165 = vunpack.c.l.b16 %v106
    %v166 = vunpack.c.l.b16 %v107
    %v167 = vunpack.c.l.b16 %v108
    %v168 = vunpack.c.l.b16 %v109
    %v169 = vunpack.c.l.b16 %v110
    %v170 = vunpack.c.l.b16 %v111
    %v171 = vunpack.c.l.b16 %v112
    %v172 = vunpack.c.l.b16 %v113
    %v173 = vunpack.c.l.b16 %v114
    %v174 = vunpack.c.l.b16 %v115
    %v175 = vpack.c.b16 %v160, %v159
    %v176 = vpack.c.b16 %v162, %v161
    %v177 = vpack.c.b16 %v164, %v163
    %v178 = vpack.c.b16 %v166, %v165
    %v179 = vpack.c.b16 %v168, %v167
    %v180 = vpack.c.b16 %v170, %v169
    %v181 = vpack.c.b16 %v172, %v171
    %v182 = vpack.c.b16 %v174, %v173
    %191 = vmatprep.subr.bf16.mxu0 0
    %192 = vmatpush1.bf16.msra.mxu0 %v175
    %193 = vmatprep.subr.bf16.mxu0 0
    %194 = vmatpush1.bf16.msra.mxu0 %v176
    %195 = vmatprep.subr.bf16.mxu0 0
    %196 = vmatpush1.bf16.msra.mxu0 %v177
    %197 = vmatprep.subr.bf16.mxu0 0
    %198 = vmatpush1.bf16.msra.mxu0 %v178
    %199 = vmatprep.subr.bf16.mxu0 0
    %200 = vmatpush1.bf16.msra.mxu0 %v179
    %201 = vmatprep.subr.bf16.mxu0 0
    %202 = vmatpush1.bf16.msra.mxu0 %v180
    %203 = vmatprep.subr.bf16.mxu0 0
    %204 = vmatpush1.bf16.msra.mxu0 %v181
    %205 = vmatprep.subr.bf16.mxu0 0
    %206 = vmatpush1.bf16.msra.mxu0 %v182
    %207 = vmatprep.subr.bf16.mxu0 0
    %208 = vmatpush1.bf16.msra.mxu0 0
    %209 = vmatprep.subr.bf16.mxu0 0
    %210 = vmatpush1.bf16.msra.mxu0 0
    %211 = vmatprep.subr.bf16.mxu0 0
    %212 = vmatpush1.bf16.msra.mxu0 0
    %213 = vmatprep.subr.bf16.mxu0 0
    %214 = vmatpush1.bf16.msra.mxu0 0
    %215 = vmatprep.subr.bf16.mxu0 0
    %216 = vmatpush1.bf16.msra.mxu0 0
    %217 = vmatprep.subr.bf16.mxu0 0
    %218 = vmatpush1.bf16.msra.mxu0 0
    %219 = vmatprep.subr.bf16.mxu0 0
    %220 = vmatpush1.bf16.msra.mxu0 0
    %221 = vmatprep.subr.bf16.mxu0 0
    %222 = vmatpush1.bf16.msra.mxu0 0
    %223 = vmatprep.mubr.bf16.mxu0 0
    %224 = vmatmul.mubr.bf16.gmra.mrb[0].mxu0 %v136
    %v225 = vpop.f32.mrb[0].mxu0
    %v226 = vadd.f32 %v141, %v225
    %v227 = vpop.f32.mrb[0].mxu0
    %v228 = vpop.f32.mrb[0].mxu0
    %v229 = vadd.f32 %v141, %v228
    %v230 = vpop.f32.mrb[0].mxu0
    %231 = vdwg.mxu0
    %v232 = vmax.f32 %v226, 0.0
    %v233 = vmax.f32 %v229, 0.0
    %v234 = vpack.c.bf16 %v233, %v232
    %v236 = vlaneseq
    %v237 = vshrl.u32 %v236, 7
    %v238 = vsub.s32 0, %v237
    %v239 = vrot.slane %v133, %v238
    %v257 = vunpack.c.l.b16 %v117
    %v258 = vunpack.c.l.b16 %v118
    %v259 = vunpack.c.l.b16 %v119
    %v260 = vunpack.c.l.b16 %v120
    %v261 = vunpack.c.l.b16 %v121
    %v262 = vunpack.c.l.b16 %v122
    %v263 = vunpack.c.l.b16 %v123
    %v264 = vunpack.c.l.b16 %v124
    %v265 = vunpack.c.l.b16 %v125
    %v266 = vunpack.c.l.b16 %v126
    %v267 = vunpack.c.l.b16 %v127
    %v268 = vunpack.c.l.b16 %v128
    %v269 = vunpack.c.l.b16 %v129
    %v270 = vunpack.c.l.b16 %v130
    %v271 = vunpack.c.l.b16 %v131
    %v272 = vunpack.c.l.b16 %v132
    %v273 = vpack.c.b16 %v258, %v257
    %v274 = vpack.c.b16 %v260, %v259
    %v275 = vpack.c.b16 %v262, %v261
    %v276 = vpack.c.b16 %v264, %v263
    %v277 = vpack.c.b16 %v266, %v265
    %v278 = vpack.c.b16 %v268, %v267
    %v279 = vpack.c.b16 %v270, %v269
    %v280 = vpack.c.b16 %v272, %v271
    %289 = vmatprep.subr.bf16.mxu0 0
    %290 = vmatpush1.bf16.msra.mxu0 %v273
    %291 = vmatprep.subr.bf16.mxu0 0
    %292 = vmatpush1.bf16.msra.mxu0 %v274
    %293 = vmatprep.subr.bf16.mxu0 0
    %294 = vmatpush1.bf16.msra.mxu0 %v275
    %295 = vmatprep.subr.bf16.mxu0 0
    %296 = vmatpush1.bf16.msra.mxu0 %v276
    %297 = vmatprep.subr.bf16.mxu0 0
    %298 = vmatpush1.bf16.msra.mxu0 %v277
    %299 = vmatprep.subr.bf16.mxu0 0
    %300 = vmatpush1.bf16.msra.mxu0 %v278
    %301 = vmatprep.subr.bf16.mxu0 0
    %302 = vmatpush1.bf16.msra.mxu0 %v279
    %303 = vmatprep.subr.bf16.mxu0 0
    %304 = vmatpush1.bf16.msra.mxu0 %v280
    %305 = vmatprep.subr.bf16.mxu0 0
    %306 = vmatpush1.bf16.msra.mxu0 0
    %307 = vmatprep.subr.bf16.mxu0 0
    %308 = vmatpush1.bf16.msra.mxu0 0
    %309 = vmatprep.subr.bf16.mxu0 0
    %310 = vmatpush1.bf16.msra.mxu0 0
    %311 = vmatprep.subr.bf16.mxu0 0
    %312 = vmatpush1.bf16.msra.mxu0 0
    %313 = vmatprep.subr.bf16.mxu0 0
    %314 = vmatpush1.bf16.msra.mxu0 0
    %315 = vmatprep.subr.bf16.mxu0 0
    %316 = vmatpush1.bf16.msra.mxu0 0
    %317 = vmatprep.subr.bf16.mxu0 0
    %318 = vmatpush1.bf16.msra.mxu0 0
    %319 = vmatprep.subr.bf16.mxu0 0
    %320 = vmatpush1.bf16.msra.mxu0 0
    %321 = vmatprep.mubr.bf16.mxu0 0
    %322 = vmatmul.mubr.bf16.gmra.mrb[0].mxu0 %v234
    %v323 = vpop.f32.mrb[0].mxu0
    %v324 = vadd.f32 %v239, %v323
    %v325 = vpop.f32.mrb[0].mxu0
    %v326 = vpop.f32.mrb[0].mxu0
    %v327 = vadd.f32 %v239, %v326
    %v328 = vpop.f32.mrb[0].mxu0
    %329 = vdwg.mxu0
    %330 = vst [vmem:[#allocation11] sm:$0xff] %v324
    %331 = vst [vmem:[#allocation11 + $0x8] sm:$0xff] %v327
    %v332 = vld [vmem:[#allocation5] sm:$0xff]
    %v333 = vld [vmem:[#allocation5 + $0x8] sm:$0xff]
    %v334 = vpack.c.bf16 %v333, %v332
    %335 = vmatprep.subr.bf16.mxu0 0
    %336 = vmatpush1.bf16.msra.mxu0 %v175
    %337 = vmatprep.subr.bf16.mxu0 0
    %338 = vmatpush1.bf16.msra.mxu0 %v176
    %339 = vmatprep.subr.bf16.mxu0 0
    %340 = vmatpush1.bf16.msra.mxu0 %v177
    %341 = vmatprep.subr.bf16.mxu0 0
    %342 = vmatpush1.bf16.msra.mxu0 %v178
    %343 = vmatprep.subr.bf16.mxu0 0
    %344 = vmatpush1.bf16.msra.mxu0 %v179
    %345 = vmatprep.subr.bf16.mxu0 0
    %346 = vmatpush1.bf16.msra.mxu0 %v180
    %347 = vmatprep.subr.bf16.mxu0 0
    %348 = vmatpush1.bf16.msra.mxu0 %v181
    %349 = vmatprep.subr.bf16.mxu0 0
    %350 = vmatpush1.bf16.msra.mxu0 %v182
    %351 = vmatprep.subr.bf16.mxu0 0
    %352 = vmatpush1.bf16.msra.mxu0 0
    %353 = vmatprep.subr.bf16.mxu0 0
    %354 = vmatpush1.bf16.msra.mxu0 0
    %355 = vmatprep.subr.bf16.mxu0 0
    %356 = vmatpush1.bf16.msra.mxu0 0
    %357 = vmatprep.subr.bf16.mxu0 0
    %358 = vmatpush1.bf16.msra.mxu0 0
    %359 = vmatprep.subr.bf16.mxu0 0
    %360 = vmatpush1.bf16.msra.mxu0 0
    %361 = vmatprep.subr.bf16.mxu0 0
    %362 = vmatpush1.bf16.msra.mxu0 0
    %363 = vmatprep.subr.bf16.mxu0 0
    %364 = vmatpush1.bf16.msra.mxu0 0
    %365 = vmatprep.subr.bf16.mxu0 0
    %366 = vmatpush1.bf16.msra.mxu0 0
    %367 = vmatprep.mubr.bf16.mxu0 0
    %368 = vmatmul.mubr.bf16.gmra.mrb[0].mxu0 %v334
    %v369 = vpop.f32.mrb[0].mxu0
    %v370 = vadd.f32 %v141, %v369
    %v371 = vpop.f32.mrb[0].mxu0
    %v372 = vpop.f32.mrb[0].mxu0
    %v373 = vadd.f32 %v141, %v372
    %v374 = vpop.f32.mrb[0].mxu0
    %375 = vdwg.mxu0
    %v376 = vmax.f32 %v370, 0.0
    %v377 = vmax.f32 %v373, 0.0
    %v378 = vpack.c.bf16 %v377, %v376
    %379 = vmatprep.subr.bf16.mxu0 0
    %380 = vmatpush1.bf16.msra.mxu0 %v273
    %381 = vmatprep.subr.bf16.mxu0 0
    %382 = vmatpush1.bf16.msra.mxu0 %v274
    %383 = vmatprep.subr.bf16.mxu0 0
    %384 = vmatpush1.bf16.msra.mxu0 %v275
    %385 = vmatprep.subr.bf16.mxu0 0
    %386 = vmatpush1.bf16.msra.mxu0 %v276
    %387 = vmatprep.subr.bf16.mxu0 0
    %388 = vmatpush1.bf16.msra.mxu0 %v277
    %389 = vmatprep.subr.bf16.mxu0 0
    %390 = vmatpush1.bf16.msra.mxu0 %v278
    %391 = vmatprep.subr.bf16.mxu0 0
    %392 = vmatpush1.bf16.msra.mxu0 %v279
    %393 = vmatprep.subr.bf16.mxu0 0
    %394 = vmatpush1.bf16.msra.mxu0 %v280
    %395 = vmatprep.subr.bf16.mxu0 0
    %396 = vmatpush1.bf16.msra.mxu0 0
    %397 = vmatprep.subr.bf16.mxu0 0
    %398 = vmatpush1.bf16.msra.mxu0 0
    %399 = vmatprep.subr.bf16.mxu0 0
    %400 = vmatpush1.bf16.msra.mxu0 0
    %401 = vmatprep.subr.bf16.mxu0 0
    %402 = vmatpush1.bf16.msra.mxu0 0
    %403 = vmatprep.subr.bf16.mxu0 0
    %404 = vmatpush1.bf16.msra.mxu0 0
    %405 = vmatprep.subr.bf16.mxu0 0
    %406 = vmatpush1.bf16.msra.mxu0 0
    %407 = vmatprep.subr.bf16.mxu0 0
    %408 = vmatpush1.bf16.msra.mxu0 0
    %409 = vmatprep.subr.bf16.mxu0 0
    %410 = vmatpush1.bf16.msra.mxu0 0
    %411 = vmatprep.mubr.bf16.mxu0 0
    %412 = vmatmul.mubr.bf16.gmra.mrb[0].mxu0 %v378
    %v413 = vpop.f32.mrb[0].mxu0
    %v414 = vadd.f32 %v239, %v413
    %v415 = vpop.f32.mrb[0].mxu0
    %v416 = vpop.f32.mrb[0].mxu0
    %v417 = vadd.f32 %v239, %v416
    %v418 = vpop.f32.mrb[0].mxu0
    %419 = vdwg.mxu0
    %420 = vst [vmem:[#allocation12] sm:$0xff] %v414
    %421 = vst [vmem:[#allocation12 + $0x8] sm:$0xff] %v417
    %v422 = vld [vmem:[#allocation7] sm:$0xff]
    %v423 = vld [vmem:[#allocation7 + $0x8] sm:$0xff]
    %v424 = vpack.c.bf16 %v423, %v422
    %425 = vmatprep.subr.bf16.mxu0 0
    %426 = vmatpush1.bf16.msra.mxu0 %v175
    %427 = vmatprep.subr.bf16.mxu0 0
    %428 = vmatpush1.bf16.msra.mxu0 %v176
    %429 = vmatprep.subr.bf16.mxu0 0
    %430 = vmatpush1.bf16.msra.mxu0 %v177
    %431 = vmatprep.subr.bf16.mxu0 0
    %432 = vmatpush1.bf16.msra.mxu0 %v178
    %433 = vmatprep.subr.bf16.mxu0 0
    %434 = vmatpush1.bf16.msra.mxu0 %v179
    %435 = vmatprep.subr.bf16.mxu0 0
    %436 = vmatpush1.bf16.msra.mxu0 %v180
    %437 = vmatprep.subr.bf16.mxu0 0
    %438 = vmatpush1.bf16.msra.mxu0 %v181
    %439 = vmatprep.subr.bf16.mxu0 0
    %440 = vmatpush1.bf16.msra.mxu0 %v182
    %441 = vmatprep.subr.bf16.mxu0 0
    %442 = vmatpush1.bf16.msra.mxu0 0
    %443 = vmatprep.subr.bf16.mxu0 0
    %444 = vmatpush1.bf16.msra.mxu0 0
    %445 = vmatprep.subr.bf16.mxu0 0
    %446 = vmatpush1.bf16.msra.mxu0 0
    %447 = vmatprep.subr.bf16.mxu0 0
    %448 = vmatpush1.bf16.msra.mxu0 0
    %449 = vmatprep.subr.bf16.mxu0 0
    %450 = vmatpush1.bf16.msra.mxu0 0
    %451 = vmatprep.subr.bf16.mxu0 0
    %452 = vmatpush1.bf16.msra.mxu0 0
    %453 = vmatprep.subr.bf16.mxu0 0
    %454 = vmatpush1.bf16.msra.mxu0 0
    %455 = vmatprep.subr.bf16.mxu0 0
    %456 = vmatpush1.bf16.msra.mxu0 0
    %457 = vmatprep.mubr.bf16.mxu0 0
    %458 = vmatmul.mubr.bf16.gmra.mrb[0].mxu0 %v424
    %v459 = vpop.f32.mrb[0].mxu0
    %v460 = vadd.f32 %v141, %v459
    %v461 = vpop.f32.mrb[0].mxu0
    %v462 = vpop.f32.mrb[0].mxu0
    %v463 = vadd.f32 %v141, %v462
    %v464 = vpop.f32.mrb[0].mxu0
    %465 = vdwg.mxu0
    %v466 = vmax.f32 %v460, 0.0
    %v467 = vmax.f32 %v463, 0.0
    %v468 = vpack.c.bf16 %v467, %v466
    %469 = vmatprep.subr.bf16.mxu0 0
    %470 = vmatpush1.bf16.msra.mxu0 %v273
    %471 = vmatprep.subr.bf16.mxu0 0
    %472 = vmatpush1.bf16.msra.mxu0 %v274
    %473 = vmatprep.subr.bf16.mxu0 0
    %474 = vmatpush1.bf16.msra.mxu0 %v275
    %475 = vmatprep.subr.bf16.mxu0 0
    %476 = vmatpush1.bf16.msra.mxu0 %v276
    %477 = vmatprep.subr.bf16.mxu0 0
    %478 = vmatpush1.bf16.msra.mxu0 %v277
    %479 = vmatprep.subr.bf16.mxu0 0
    %480 = vmatpush1.bf16.msra.mxu0 %v278
    %481 = vmatprep.subr.bf16.mxu0 0
    %482 = vmatpush1.bf16.msra.mxu0 %v279
    %483 = vmatprep.subr.bf16.mxu0 0
    %484 = vmatpush1.bf16.msra.mxu0 %v280
    %485 = vmatprep.subr.bf16.mxu0 0
    %486 = vmatpush1.bf16.msra.mxu0 0
    %487 = vmatprep.subr.bf16.mxu0 0
    %488 = vmatpush1.bf16.msra.mxu0 0
    %489 = vmatprep.subr.bf16.mxu0 0
    %490 = vmatpush1.bf16.msra.mxu0 0
    %491 = vmatprep.subr.bf16.mxu0 0
    %492 = vmatpush1.bf16.msra.mxu0 0
    %493 = vmatprep.subr.bf16.mxu0 0
    %494 = vmatpush1.bf16.msra.mxu0 0
    %495 = vmatprep.subr.bf16.mxu0 0
    %496 = vmatpush1.bf16.msra.mxu0 0
    %497 = vmatprep.subr.bf16.mxu0 0
    %498 = vmatpush1.bf16.msra.mxu0 0
    %499 = vmatprep.subr.bf16.mxu0 0
    %500 = vmatpush1.bf16.msra.mxu0 0
    %501 = vmatprep.mubr.bf16.mxu0 0
    %502 = vmatmul.mubr.bf16.gmra.mrb[0].mxu0 %v468
    %v503 = vpop.f32.mrb[0].mxu0
    %v504 = vadd.f32 %v239, %v503
    %v505 = vpop.f32.mrb[0].mxu0
    %v506 = vpop.f32.mrb[0].mxu0
    %v507 = vadd.f32 %v239, %v506
    %v508 = vpop.f32.mrb[0].mxu0
    %509 = vdwg.mxu0
    %510 = vst [vmem:[#allocation14] sm:$0xff] %v504
    %511 = vst [vmem:[#allocation14 + $0x8] sm:$0xff] %v507
    // Predicated region
    $region50: #{tpu_custom_call.1} parent=1 // pred_check
      _
    $region51: #{tpu_custom_call.1} parent=1 // pred_check_branch
      %513 = sbr.rel (0) target = $region53
    $region52: #{tpu_custom_call.1} parent=1 // pred_region
      %s515 = ssub.s32 256, 256
      %516 = vsyncadd [#allocation4], %s515
      %s517 = sshll.u32 [#allocation11], 4
      %s518 = int_to_ptr.vmem [resolvable:$true] %s517
      %523 = dma.vmem_to_hbm [thread:$0]  %s518, 256, %s7, [#allocation4], 128, 128, 8
    $region53: #{tpu_custom_call.1} parent=1 // pred_fallthru
      _
    // Predicated region
    $region54: #{tpu_custom_call.1} parent=1 // pred_check
      _
    $region55: #{tpu_custom_call.1} parent=1 // pred_check_branch
      %525 = sbr.rel (0) target = $region57
    $region56: #{tpu_custom_call.1} parent=1 // pred_region
      %s527 = ssub.s32 256, 256
      %528 = vsyncadd [#allocation13], %s527
      %s529 = sshll.u32 [#allocation12], 4
      %s530 = int_to_ptr.vmem [resolvable:$true] %s529
      %535 = dma.vmem_to_hbm [thread:$0]  %s530, 256, %s8, [#allocation13], 128, 128, 8
    $region57: #{tpu_custom_call.1} parent=1 // pred_fallthru
      _
    // Predicated region
    $region58: #{tpu_custom_call.1} parent=1 // pred_check
      _
    $region59: #{tpu_custom_call.1} parent=1 // pred_check_branch
      %537 = sbr.rel (0) target = $region61
    $region60: #{tpu_custom_call.1} parent=1 // pred_region
      %s539 = ssub.s32 256, 256
      %540 = vsyncadd [#allocation13], %s539
      %s541 = sshll.u32 [#allocation14], 4
      %s542 = int_to_ptr.vmem [resolvable:$true] %s541
      %547 = dma.vmem_to_hbm [thread:$0]  %s542, 256, %s9, [#allocation13], 128, 128, 8
    $region61: #{tpu_custom_call.1} parent=1 // pred_fallthru
      _
    // Predicated region
    $region62: #{tpu_custom_call.1} parent=1 // pred_check
      _
    $region63: #{tpu_custom_call.1} parent=1 // pred_check_branch
      %549 = sbr.rel (0) target = $region65
    $region64: #{tpu_custom_call.1} parent=1 // pred_region
      %550 = dma.done [#allocation4], 256
    $region65: #{tpu_custom_call.1} parent=1 // pred_fallthru
      _
    // Predicated region
    $region66: #{tpu_custom_call.1} parent=1 // pred_check
      _
    $region67: #{tpu_custom_call.1} parent=1 // pred_check_branch
      %552 = sbr.rel (0) target = $region69
    $region68: #{tpu_custom_call.1} parent=1 // pred_region
      %553 = dma.done [#allocation13], 256
    $region69: #{tpu_custom_call.1} parent=1 // pred_fallthru
      _
    // Predicated region
    $region70: #{tpu_custom_call.1} parent=1 // pred_check
      _
    $region71: #{tpu_custom_call.1} parent=1 // pred_check_branch
      %555 = sbr.rel (0) target = $region73
    $region72: #{tpu_custom_call.1} parent=1 // pred_region
      %556 = dma.done [#allocation13], 256
    $region73: #{tpu_custom_call.1} parent=1 // pred_fallthru
      _
    %557 = vsyncpa [#allocation3], 1
    %558 = vsyncpa [#allocation6], 1
    %559 = vsyncpa [#allocation9], 1
    %560 = vsyncpa [#allocation4], 1
    %561 = vsyncpa [#allocation13], 1

</llo_original>
